<compile_context>
chip_gen: v5e
topology: v5e:2x2
jax: 0.10.0
libtpu: 0.0.40
codegen_flags: <defaults>
</compile_context>

<pallas_src>
import math

import jax
import jax.numpy as jnp
from jax import lax
from jax.experimental import pallas as pl
from jax.experimental.pallas import tpu as pltpu


_SQRT1_2 = 0.7071067811865476  # 1 / sqrt(2)

# Abramowitz & Stegun 7.1.26 erf coefficients with the GeLU 0.5 folded in.
_ERF_P = 0.3275911
_H_A1 = 0.5 * 0.254829592
_H_A2 = 0.5 * -0.284496736
_H_A3 = 0.5 * 1.421413741
_H_A4 = 0.5 * -1.453152027
_H_A5 = 0.5 * 1.061405429


def _gelu_kernel(x_ref, o_ref):
    x = x_ref[...].astype(jnp.float32)
    z = x * _SQRT1_2
    a = jnp.abs(z)
    # EUP reciprocal instead of a multi-op VALU Newton divide.
    t = pl.reciprocal(1.0 + _ERF_P * a, approx=False)
    poly_half = ((((_H_A5 * t + _H_A4) * t + _H_A3) * t + _H_A2) * t + _H_A1) * t
    h = poly_half * jnp.exp(-a * a)          # = 0.5 * (1 - erf(|x|/sqrt(2)))
    cdf = jnp.where(x < 0.0, h, 1.0 - h)     # branch-free, 0.5 already folded in
    o_ref[...] = (x * cdf).astype(o_ref.dtype)


def _round_up(a, b):
    return -(-a // b) * b


def _gelu_small(x):
    """Plain-jnp GeLU for <=127-element ragged tails (not worth a kernel)."""
    xf = x.astype(jnp.float32)
    cdf = 0.5 * (1.0 + lax.erf(xf * _SQRT1_2))
    return (xf * cdf).astype(x.dtype)


def _gelu_rows(x2, block_rows):
    rows, lanes = x2.shape
    return pl.pallas_call(
        _gelu_kernel,
        out_shape=jax.ShapeDtypeStruct(x2.shape, x2.dtype),
        grid=(pl.cdiv(rows, block_rows),),
        in_specs=[pl.BlockSpec((block_rows, lanes), lambda i: (i, 0))],
        out_specs=pl.BlockSpec((block_rows, lanes), lambda i: (i, 0)),
        compiler_params=pltpu.CompilerParams(
            dimension_semantics=("parallel",)),
    )(x2)


def gelu(x, *, max_rows_per_block=4096):
    """Exact GeLU: x * 0.5 * (1 + erf(x / sqrt(2))), any shape, any float dtype."""
    orig_shape = x.shape
    n = x.size
    if n == 0:
        return x

    lanes = 128
    itemsize = jnp.dtype(x.dtype).itemsize
    # Sublane multiple: 8 for 32-bit, 16 for 16-bit, 32 for 8-bit dtypes.
    sub = 8 * max(1, 4 // itemsize)
    max_rows_per_block = _round_up(max(int(max_rows_per_block), sub), sub)

    n_main = (n // lanes) * lanes
    if n_main == 0:
        # Fewer than 128 elements total: kernel launch overhead dominates.
        return _gelu_small(x)

    rows = n_main // lanes
    block_rows = min(max_rows_per_block, _round_up(rows, sub))
    # v7x megacore balance: ensure >= 2 grid steps for mid-size inputs so the
    # "parallel" grid axis shards across both TensorCores.  (512 rows = 256 KiB
    # f32 per block keeps per-step DMA time >> the ~0.35 us grid-step cost.)
    if pl.cdiv(rows, block_rows) < 2 and rows >= 1024:
        block_rows = max(512, _round_up(pl.cdiv(rows, 2), sub))

    flat = x.reshape(-1)                      # bitcast, free
    if n_main == n:
        out2 = _gelu_rows(flat.reshape(rows, lanes), block_rows)
        return out2.reshape(orig_shape)

    # Ragged tail (<128 elements): kernel on the aligned prefix, jnp on the tail.
    main = flat[:n_main].reshape(rows, lanes)
    out_main = _gelu_rows(main, block_rows).reshape(-1)
    out_tail = _gelu_small(flat[n_main:])
    return jnp.concatenate([out_main, out_tail]).reshape(orig_shape)


def _reference_gelu(x):
    """Pure-JAX reference matching the PyTorch module."""
    xf = x.astype(jnp.float32)
    cdf = 0.5 * (1.0 + lax.erf(xf * (1.0 / math.sqrt(2.0))))
    return (xf * cdf).astype(x.dtype)


if __name__ == "__main__":
    key = jax.random.PRNGKey(0)
    N, C, H, W = 2, 4, 16, 16
    x = jax.random.normal(key, (N, C, H, W), dtype=jnp.float32)

    out = gelu(x)
    out = jax.block_until_ready(out)

    ref = _reference_gelu(x)
    assert out.shape == x.shape, out.shape
    max_err = float(jnp.max(jnp.abs(out - ref)))
    assert jnp.allclose(out, ref, atol=1e-5, rtol=1e-5), f"mismatch, max err {max_err}"

    # Also exercise a shape with a ragged (non-128-aligned) element count.
    x_odd = jax.random.normal(jax.random.PRNGKey(1), (3, 7, 13), dtype=jnp.float32)
    out_odd = jax.block_until_ready(gelu(x_odd))
    assert jnp.allclose(out_odd, _reference_gelu(x_odd), atol=1e-5, rtol=1e-5)

    print("KERNEL_OK")
</pallas_src>

<mosaic_0001>
module attributes {stable_mosaic.version = 11 : i64} {
  func.func @_gelu_kernel(%arg0: i32, %arg1: memref<16x128xf32, #tpu.memory_space<vmem>>, %arg2: memref<16x128xf32, #tpu.memory_space<vmem>>) attributes {dimension_semantics = [#tpu.dimension_semantics<parallel>], iteration_bounds = array<i64: 1>, scalar_prefetch = 0 : i64, scratch_operands = 0 : i64, tpu.core_type = #tpu.core_type<tc>, window_params = [{transform_indices = @transform_0, window_bounds = array<i64: 16, 128>}, {transform_indices = @transform_1, window_bounds = array<i64: 16, 128>}]} {
    %c0 = arith.constant 0 : index
    %c0_0 = arith.constant 0 : index
    %0 = vector.load %arg1[%c0, %c0_0] : memref<16x128xf32, #tpu.memory_space<vmem>>, vector<16x128xf32>
    %cst = arith.constant 0.707106769 : f32
    %1 = vector.broadcast %cst : f32 to vector<16x128xf32>
    %2 = arith.mulf %0, %1 : vector<16x128xf32>
    %3 = math.absf %2 : vector<16x128xf32>
    %cst_1 = arith.constant 0.327591091 : f32
    %4 = vector.broadcast %cst_1 : f32 to vector<16x128xf32>
    %5 = arith.mulf %4, %3 : vector<16x128xf32>
    %cst_2 = arith.constant 1.000000e+00 : f32
    %6 = vector.broadcast %cst_2 : f32 to vector<16x128xf32>
    %7 = arith.addf %6, %5 : vector<16x128xf32>
    %8 = tpu.reciprocal %7 : vector<16x128xf32> -> vector<16x128xf32>
    %cst_3 = arith.constant 0.53070271 : f32
    %9 = vector.broadcast %cst_3 : f32 to vector<16x128xf32>
    %10 = arith.mulf %9, %8 : vector<16x128xf32>
    %cst_4 = arith.constant -0.72657603 : f32
    %11 = vector.broadcast %cst_4 : f32 to vector<16x128xf32>
    %12 = arith.addf %10, %11 : vector<16x128xf32>
    %13 = arith.mulf %12, %8 : vector<16x128xf32>
    %cst_5 = arith.constant 0.710706889 : f32
    %14 = vector.broadcast %cst_5 : f32 to vector<16x128xf32>
    %15 = arith.addf %13, %14 : vector<16x128xf32>
    %16 = arith.mulf %15, %8 : vector<16x128xf32>
    %cst_6 = arith.constant -0.142248362 : f32
    %17 = vector.broadcast %cst_6 : f32 to vector<16x128xf32>
    %18 = arith.addf %16, %17 : vector<16x128xf32>
    %19 = arith.mulf %18, %8 : vector<16x128xf32>
    %cst_7 = arith.constant 0.127414793 : f32
    %20 = vector.broadcast %cst_7 : f32 to vector<16x128xf32>
    %21 = arith.addf %19, %20 : vector<16x128xf32>
    %22 = arith.mulf %21, %8 : vector<16x128xf32>
    %cst_8 = arith.constant 0.000000e+00 : f32
    %23 = vector.broadcast %cst_8 : f32 to vector<16x128xf32>
    %24 = arith.subf %23, %3 : vector<16x128xf32>
    %25 = arith.mulf %24, %3 : vector<16x128xf32>
    %26 = math.exp %25 : vector<16x128xf32>
    %27 = arith.mulf %22, %26 : vector<16x128xf32>
    %cst_9 = arith.constant 0.000000e+00 : f32
    %28 = vector.broadcast %cst_9 : f32 to vector<16x128xf32>
    %29 = arith.cmpf olt, %0, %28 : vector<16x128xf32>
    %cst_10 = arith.constant 1.000000e+00 : f32
    %30 = vector.broadcast %cst_10 : f32 to vector<16x128xf32>
    %31 = arith.subf %30, %27 : vector<16x128xf32>
    %32 = arith.select %29, %27, %31 : vector<16x128xi1>, vector<16x128xf32>
    %33 = arith.mulf %0, %32 : vector<16x128xf32>
    %c0_11 = arith.constant 0 : index
    %c0_12 = arith.constant 0 : index
    %34 = vector.load %arg2[%c0_11, %c0_12] : memref<16x128xf32, #tpu.memory_space<vmem>>, vector<16x128xf32>
    tpu.vector_store %arg2[%c0_11, %c0_12], %33 {strides = array<i32>} : memref<16x128xf32, #tpu.memory_space<vmem>>, vector<16x128xf32>,
    return
  }
  func.func @transform_0(%arg0: i32) -> (i32, i32) {
    %c0_i32 = arith.constant 0 : i32
    %c0_i32_0 = arith.constant 0 : i32
    return %arg0, %c0_i32 : i32, i32
  }
  func.func @transform_1(%arg0: i32) -> (i32, i32) {
    %c0_i32 = arith.constant 0 : i32
    %c0_i32_0 = arith.constant 0 : i32
    return %arg0, %c0_i32 : i32, i32
  }
}

</mosaic_0001>

<llo_original>
// kernel: tpu_custom_call.1
$region0: #{tpu_custom_call.1}
  #allocation0 [shape = 'u32[]', space=smem, size = 0x4, offset = 0x4, fixed_abs, tag = 'smem constant byte address 0x4 - core index']
  #allocation1 [shape = 'u32[72,128]{1,0:T(1,128)}', space=vmem, size = 0x9000, scoped, tag = 'internal scratch']
  %s0 = inlined_call_operand.hbm [shape: f32[16,128], index: 0, kind: input, shape index: {}]
  %s1 = inlined_call_operand.hbm [shape: f32[16,128], index: 1, kind: output, shape index: {}]
  %s2 = sld [smem:[#allocation0]]
  $region18: #{tpu_custom_call.1} parent=0
    _
  %s4 = ssub.s32 1, %s2
  %s5 = scalar_select 0, %s4, %s2
  $region1: #{tpu_custom_call.1} parent=0
    #allocation2 [shape = 'u8[8192]{0}', space=vmem, size = 0x2000, scoped, tag = 'input window, operand 0, single buffered']
    #allocation3 [shape = 's32[1]{0}', space=sflag, size = 0x4, scoped, tag = 'scoped memory for tpu_custom_call.1']
    #allocation4 [shape = 's32[1]{0}', space=sflag, size = 0x4, scoped, tag = 'scoped memory for tpu_custom_call.1']
    #allocation5 [shape = 'u8[8192]{0}', space=vmem, size = 0x2000, scoped, tag = 'output window, operand 0, single buffered']
    %6 = vsyncpa [#allocation3], 0
    %7 = vsyncpa [#allocation4], 0
    // Predicated region
    $region2: #{tpu_custom_call.1} parent=1 // pred_check
      _
    $region3: #{tpu_custom_call.1} parent=1 // pred_check_branch
      %9 = sbr.rel (0) target = $region5
    $region4: #{tpu_custom_call.1} parent=1 // pred_region
      %11 = vsyncadd [#allocation3], 0
      %s12 = sshll.u32 %s0, 4
      %s13 = int_to_ptr.hbm [resolvable:$true] %s12
      %s14 = sshll.u32 [#allocation2], 4
      %s15 = int_to_ptr.vmem [resolvable:$true] %s14
      %20 = dma.hbm_to_vmem [thread:$0]  %s13, 256, %s15, [#allocation3], 128, 128, 8
    $region5: #{tpu_custom_call.1} parent=1 // pred_fallthru
      _
    // Predicated region
    $region6: #{tpu_custom_call.1} parent=1 // pred_check
      _
    $region7: #{tpu_custom_call.1} parent=1 // pred_check_branch
      %22 = sbr.rel (0) target = $region9
    $region8: #{tpu_custom_call.1} parent=1 // pred_region
      %24 = dma.done [#allocation3], 256
    $region9: #{tpu_custom_call.1} parent=1 // pred_fallthru
      _
    %v25 = vld [vmem:[#allocation2] sm:$0xff]
    %v26 = vld [vmem:[#allocation2 + $0x8] sm:$0xff]
    %v27 = vmul.f32 %v25, 0.70710677
    %v28 = vmul.f32 %v26, 0.70710677
    %v29 = vand.u32 2147483647, %v27
    %v30 = vand.u32 2147483647, %v28
    %v31 = vmul.f32 %v29, 0.3275911
    %v32 = vmul.f32 %v30, 0.3275911
    %v33 = vadd.f32 %v31, 1.0
    %v34 = vadd.f32 %v32, 1.0
    %v35 = vrcp.pop %v33
    %v36 = vmul.f32 %v33, %v35
    %v37 = vsub.f32 1.0, %v36
    %v38 = vmul.f32 %v35, %v37
    %v39 = vadd.f32 %v35, %v38
    %vm40 = vweird.f32 %v33
    %vm41 = vweird.f32 %v35
    %vm42 = vmor %vm40, %vm41
    %v43 = vsel %vm42, %v35, %v39
    %v44 = vand.u32 2147483647, %v33
    %vm45 = vcmp.eq.f32.partialorder %v44, 8.507059e+37
    %v46 = vand.u32 %v33, 2147483648
    %v47 = vor.u32 1.1754944e-38, %v46
    %v48 = vsel %vm45, %v47, %v43
    %v49 = vrcp.pop %v34
    %v50 = vmul.f32 %v34, %v49
    %v51 = vsub.f32 1.0, %v50
    %v52 = vmul.f32 %v49, %v51
    %v53 = vadd.f32 %v49, %v52
    %vm54 = vweird.f32 %v34
    %vm55 = vweird.f32 %v49
    %vm56 = vmor %vm54, %vm55
    %v57 = vsel %vm56, %v49, %v53
    %v58 = vand.u32 2147483647, %v34
    %vm59 = vcmp.eq.f32.partialorder %v58, 8.507059e+37
    %v60 = vand.u32 %v34, 2147483648
    %v61 = vor.u32 1.1754944e-38, %v60
    %v62 = vsel %vm59, %v61, %v57
    %v63 = vmul.f32 %v48, 0.5307027
    %v64 = vmul.f32 %v62, 0.5307027
    %v65 = vadd.f32 %v63, -0.72657603
    %v66 = vadd.f32 %v64, -0.72657603
    %v67 = vmul.f32 %v65, %v48
    %v68 = vmul.f32 %v66, %v62
    %v69 = vadd.f32 %v67, 0.7107069
    %v70 = vadd.f32 %v68, 0.7107069
    %v71 = vmul.f32 %v69, %v48
    %v72 = vmul.f32 %v70, %v62
    %v73 = vadd.f32 %v71, -0.14224836
    %v74 = vadd.f32 %v72, -0.14224836
    %v75 = vmul.f32 %v73, %v48
    %v76 = vmul.f32 %v74, %v62
    %v77 = vadd.f32 %v75, 0.1274148
    %v78 = vadd.f32 %v76, 0.1274148
    %v79 = vmul.f32 %v77, %v48
    %v80 = vmul.f32 %v78, %v62
    %v81 = vsub.f32 0.0, %v29
    %v82 = vsub.f32 0.0, %v30
    %v83 = vmul.f32 %v81, %v29
    %v84 = vmul.f32 %v82, %v30
    %v85 = vmul.f32 %v83, 1.442695
    %v86 = vpow.pop %v85
    %v87 = vmul.f32 %v84, 1.442695
    %v88 = vpow.pop %v87
    %v89 = vmul.f32 %v79, %v86
    %v90 = vmul.f32 %v80, %v88
    %vm91 = vcmp.lt.f32.partialorder %v25, 0.0
    %vm92 = vcmp.lt.f32.partialorder %v26, 0.0
    %v93 = vsub.f32 1.0, %v89
    %v94 = vsub.f32 1.0, %v90
    %v95 = vsel %vm91, %v89, %v93
    %v96 = vsel %vm92, %v90, %v94
    %v97 = vmul.f32 %v25, %v95
    %v98 = vmul.f32 %v26, %v96
    %99 = vst [vmem:[#allocation5] sm:$0xff] %v97
    %100 = vst [vmem:[#allocation5 + $0x8] sm:$0xff] %v98
    // Predicated region
    $region10: #{tpu_custom_call.1} parent=1 // pred_check
      _
    $region11: #{tpu_custom_call.1} parent=1 // pred_check_branch
      %102 = sbr.rel (0) target = $region13
    $region12: #{tpu_custom_call.1} parent=1 // pred_region
      %104 = vsyncadd [#allocation4], 0
      %s105 = sshll.u32 [#allocation5], 4
      %s106 = int_to_ptr.vmem [resolvable:$true] %s105
      %s107 = sshll.u32 %s1, 4
      %s108 = int_to_ptr.hbm [resolvable:$true] %s107
      %113 = dma.vmem_to_hbm [thread:$0]  %s106, 256, %s108, [#allocation4], 128, 128, 8
    $region13: #{tpu_custom_call.1} parent=1 // pred_fallthru
      _
    // Predicated region
    $region14: #{tpu_custom_call.1} parent=1 // pred_check
      _
    $region15: #{tpu_custom_call.1} parent=1 // pred_check_branch
      %115 = sbr.rel (0) target = $region17
    $region16: #{tpu_custom_call.1} parent=1 // pred_region
      %117 = dma.done [#allocation4], 256
    $region17: #{tpu_custom_call.1} parent=1 // pred_fallthru
      _
    %118 = vsyncpa [#allocation3], 1
    %119 = vsyncpa [#allocation4], 1

</llo_original>
